<compile_context>
chip_gen: v7x
topology: tpu7x:2x2x1
jax: 0.10.0
libtpu: 0.0.40
codegen_flags: <defaults>
</compile_context>

<pallas_src>
import jax
import jax.numpy as jnp
from jax import lax
from jax.experimental import pallas as pl
from jax.experimental.pallas import tpu as pltpu


# ---------------------------------------------------------------------------
# Trace-time helper
# ---------------------------------------------------------------------------
def _bilinear_matrix(n_in: int, n_out: int) -> jnp.ndarray:
    """1-D align_corners=True bilinear interpolation matrix A: out = A @ in."""
    if n_in == 1:
        return jnp.ones((n_out, 1), jnp.float32)
    src = jnp.arange(n_out, dtype=jnp.float32) * (n_in - 1) / (n_out - 1)
    i0 = jnp.clip(jnp.floor(src), 0, n_in - 2).astype(jnp.int32)
    frac = src - i0.astype(jnp.float32)
    rows = jnp.arange(n_out)
    a = jnp.zeros((n_out, n_in), jnp.float32)
    a = a.at[rows, i0].add(1.0 - frac)
    a = a.at[rows, i0 + 1].add(frac)
    return a


# ---------------------------------------------------------------------------
# Pallas kernel: 1x1 conv -> (per output row) height lerp -> width matmul ->
#                softmax over K bins -> expectation against bin centers
# ---------------------------------------------------------------------------
def danet_head_kernel(feat_ref, w_ref, bias_ref, aw_ref, cen_ref, out_ref,
                      logits_ref):
    # feat_ref   : (C, HW)   f32  decoder feature, pure reshape of NCHW
    # w_ref      : (C, K)    f32  1x1 conv weight (transposed)
    # bias_ref   : (1, K)    f32  1x1 conv bias
    # aw_ref     : (2W, W)   f32  width-upsample operator (single copy, resident)
    # cen_ref    : (1, K)    f32  per-batch depth-bin centers
    # out_ref    : (2H, 2W)  f32  per-batch depth prediction
    # logits_ref : (HW, K)   f32  scratch: low-res conv logits
    C, HW = feat_ref.shape
    two_w, W = aw_ref.shape
    two_h = out_ref.shape[0]
    H = HW // W
    K = w_ref.shape[1]

    # (1) 1x1 conv on the LOW-RES feature map (conv commutes with the bilinear
    #     upsample).  Contract over C (dim 0 of both operands) so the feature
    #     tile keeps its natural lane-dense (C, HW) layout -- f32 MXU dot.
    logits = lax.dot_general(
        feat_ref[...], w_ref[...],
        dimension_numbers=(((0,), (0,)), ((), ())),
        preferred_element_type=jnp.float32)                       # (HW, K)
    logits_ref[...] = logits + bias_ref[...]

    a_w = aw_ref[...]        # hoisted out of the loop (stays in vregs / VMEM)
    centers = cen_ref[...]   # (1, K)

    # align_corners=True source-coordinate scale for the height pass.
    h_scale = (H - 1) / (two_h - 1) if H > 1 else 0.0
    i0_max = max(H - 2, 0)

    # (2) per output row p: height lerp of two low-res logit row blocks, one
    #     (2W, W) @ (W, K) width matmul, softmax over the K bins and the
    #     depth expectation.  Nothing of size (4HW, K) is ever materialized.
    # TODO(synk): on v6e/v7x the lerp/exp below can run in bfloat16 (bf16
    # VPU/EUP) and the logits scratch can be stored bf16; kept f32 here so the
    # same code is exact on v5e and on the CPU interpreter.
    def row_body(p, carry):
        src = p.astype(jnp.float32) * h_scale
        i0 = jnp.clip(jnp.floor(src).astype(jnp.int32), 0, i0_max)
        i1 = jnp.minimum(i0 + 1, H - 1)
        frac = src - i0.astype(jnp.float32)

        l0 = logits_ref[pl.ds(i0 * W, W), :]                      # (W, K)
        l1 = logits_ref[pl.ds(i1 * W, W), :]                      # (W, K)
        l_p = l0 + frac * (l1 - l0)                               # height lerp

        y = jnp.dot(a_w, l_p, preferred_element_type=jnp.float32)  # (2W, K)

        m = jnp.max(y, axis=-1, keepdims=True)
        e = jnp.exp(y - m)                                        # (2W, K)
        num = jnp.sum(e * centers, axis=-1)                       # (2W,)
        den = jnp.sum(e, axis=-1)                                 # (2W,)
        out_ref[pl.ds(p, 1), :] = jnp.reshape(num / den, (1, two_w))
        return carry

    lax.fori_loop(0, two_h, row_body, 0)


def danet_head(feat, w_ck, bias, a_w, centers):
    N, C, HW = feat.shape
    K = w_ck.shape[1]
    two_w, W = a_w.shape
    H = HW // W
    two_h = 2 * H

    cost = pl.CostEstimate(
        flops=int(N * (2 * HW * C * K                     # 1x1 conv
                       + two_h * (3 * W * K               # height lerp
                                  + 2 * two_w * W * K     # width matmul
                                  + 4 * two_w * K))),     # softmax + expectation
        transcendentals=int(N * two_h * two_w * K),
        bytes_accessed=int(4 * (feat.size + w_ck.size + bias.size
                                + a_w.size + centers.size
                                + N * two_h * two_w)),
    )

    # TODO(synk): at real decoder resolutions add a second "parallel" grid axis
    # tiling the output rows (feeds both v7x TensorCores when N==1 and drops the
    # (HW, K) logit scratch per step), and set vmem_limit_bytes with headroom
    # below the 64 MiB v7x physical VMEM.
    return pl.pallas_call(
        danet_head_kernel,
        out_shape=jax.ShapeDtypeStruct((N, two_h, two_w), jnp.float32),
        grid_spec=pltpu.PrefetchScalarGridSpec(
            num_scalar_prefetch=0,
            grid=(N,),
            in_specs=[
                pl.BlockSpec((None, C, HW), lambda n: (n, 0, 0)),   # feature (C, HW)
                pl.BlockSpec((C, K), lambda n: (0, 0)),             # conv weight^T
                pl.BlockSpec((1, K), lambda n: (0, 0)),             # conv bias
                pl.BlockSpec((two_w, W), lambda n: (0, 0)),         # width operator
                pl.BlockSpec((None, 1, K), lambda n: (n, 0, 0)),    # bin centers
            ],
            out_specs=pl.BlockSpec((None, two_h, two_w), lambda n: (n, 0, 0)),
            scratch_shapes=[pltpu.VMEM((HW, K), jnp.float32)],
        ),
        compiler_params=pltpu.CompilerParams(dimension_semantics=("parallel",)),
        cost_estimate=cost,
    )(feat, w_ck, bias, a_w, centers)


# ---------------------------------------------------------------------------
# DANet.forward tail (everything written explicitly in the PyTorch forward)
# ---------------------------------------------------------------------------
def danet_forward(decoder_feat_nchw, bin_widths_normed, conv_w, conv_b,
                  min_depth, max_depth):
    N, C, H, W = decoder_feat_nchw.shape
    K = bin_widths_normed.shape[1]

    # bin widths -> edges -> centers (pad value 0.01 matches the torch code)
    bin_widths = (max_depth - min_depth) * bin_widths_normed               # (N, K)
    bin_widths = jnp.pad(bin_widths, ((0, 0), (1, 0)), constant_values=0.01)
    bin_edges = jnp.cumsum(bin_widths, axis=1)                             # (N, K+1)
    centers = 0.5 * (bin_edges[:, :-1] + bin_edges[:, 1:])                 # (N, K)

    # feature as (N, C, HW): a pure reshape of NCHW, no wrapper transpose.
    feat = decoder_feat_nchw.reshape(N, C, H * W).astype(jnp.float32)
    w_ck = conv_w.reshape(K, C).T.astype(jnp.float32)                      # (C, K)
    bias = conv_b.reshape(1, K).astype(jnp.float32)
    a_w = _bilinear_matrix(W, 2 * W)                                       # (2W, W)

    pred = danet_head(feat, w_ck, bias, a_w, centers.reshape(N, 1, K))
    pred = pred.reshape(N, 1, 2 * H, 2 * W)                                # NCHW
    return bin_edges, [pred]


# ---------------------------------------------------------------------------
if __name__ == "__main__":
    key = jax.random.PRNGKey(0)
    k1, k2, k3, k4 = jax.random.split(key, 4)

    N, C, H, W, K = 2, 16, 8, 8, 256        # decoder_feature=16, 256 bins (conv_out)
    min_depth, max_depth = 0.1, 10.0

    # TODO(synk): feature_extraction (get_models backbone), Pyramid_Scene_Transformer
    # and modules.Decoder source is not provided; their outputs (decoder feature map
    # and normalized bin widths) are synthesized deterministically here.
    decoder_feat = jax.random.normal(k1, (N, C, H, W), jnp.float32)        # multiscale_depth[-1]
    bin_widths_normed = jax.nn.softmax(jax.random.normal(k2, (N, K)), axis=1)

    # nn.Conv2d(16, 256, kernel_size=1) parameters, deterministic init
    conv_w = 0.1 * jax.random.normal(k3, (K, C, 1, 1), jnp.float32)
    conv_b = 0.01 * jax.random.normal(k4, (K,), jnp.float32)

    bin_edges, preds = danet_forward(decoder_feat, bin_widths_normed,
                                     conv_w, conv_b, min_depth, max_depth)
    pred = preds[0]
    jax.block_until_ready(pred)

    # pure-JAX f32 reference of the same head (upsample -> conv -> softmax -> centers)
    a_h_ref = _bilinear_matrix(H, 2 * H)
    a_w_ref = _bilinear_matrix(W, 2 * W)
    up_ref = jnp.einsum('ph,nchw,qw->ncpq', a_h_ref, decoder_feat, a_w_ref)
    logits_ref = jnp.einsum('ncpq,kc->nkpq', up_ref, conv_w[:, :, 0, 0]) \
        + conv_b[None, :, None, None]
    soft_ref = jax.nn.softmax(logits_ref, axis=1)
    bw = jnp.pad((max_depth - min_depth) * bin_widths_normed,
                 ((0, 0), (1, 0)), constant_values=0.01)
    be = jnp.cumsum(bw, axis=1)
    cen = 0.5 * (be[:, :-1] + be[:, 1:])
    pred_ref = jnp.sum(soft_ref * cen[:, :, None, None], axis=1, keepdims=True)

    assert pred.shape == (N, 1, 2 * H, 2 * W)
    assert bin_edges.shape == (N, K + 1)
    assert bool(jnp.all(jnp.isfinite(pred)))
    assert bool(jnp.allclose(pred, pred_ref, rtol=1e-2, atol=1e-2))

    print("KERNEL_OK")
</pallas_src>

<mosaic_0001>
module attributes {stable_mosaic.version = 11 : i64} {
  func.func @danet_head_kernel(%arg0: i32, %arg1: memref<1x16x64xf32, #tpu.memory_space<vmem>>, %arg2: memref<16x256xf32, #tpu.memory_space<vmem>>, %arg3: memref<1x256xf32, #tpu.memory_space<vmem>>, %arg4: memref<16x8xf32, #tpu.memory_space<vmem>>, %arg5: memref<1x1x256xf32, #tpu.memory_space<vmem>>, %arg6: memref<1x16x16xf32, #tpu.memory_space<vmem>>, %arg7: memref<64x256xf32, #tpu.memory_space<vmem>>) attributes {dimension_semantics = [#tpu.dimension_semantics<parallel>], iteration_bounds = array<i64: 2>, scalar_prefetch = 0 : i64, scratch_operands = 1 : i64, tpu.core_type = #tpu.core_type<tc>, window_params = [{transform_indices = @transform_0, window_bounds = array<i64: 1, 16, 64>}, {pipeline_mode = #tpu.pipeline_mode<synchronous>, transform_indices = @transform_1, window_bounds = array<i64: 16, 256>}, {pipeline_mode = #tpu.pipeline_mode<synchronous>, transform_indices = @transform_2, window_bounds = array<i64: 1, 256>}, {pipeline_mode = #tpu.pipeline_mode<synchronous>, transform_indices = @transform_3, window_bounds = array<i64: 16, 8>}, {transform_indices = @transform_4, window_bounds = array<i64: 1, 1, 256>}, {transform_indices = @transform_5, window_bounds = array<i64: 1, 16, 16>}]} {
    %c0 = arith.constant 0 : index
    %c0_0 = arith.constant 0 : index
    %c0_1 = arith.constant 0 : index
    %0 = vector.load %arg1[%c0, %c0_0, %c0_1] : memref<1x16x64xf32, #tpu.memory_space<vmem>>, vector<1x16x64xf32>
    %1 = vector.shape_cast %0 : vector<1x16x64xf32> to vector<16x64xf32>
    %c0_2 = arith.constant 0 : index
    %c0_3 = arith.constant 0 : index
    %2 = vector.load %arg2[%c0_2, %c0_3] : memref<16x256xf32, #tpu.memory_space<vmem>>, vector<16x256xf32>
    %cst = arith.constant dense<0.000000e+00> : vector<64x256xf32>
    %3 = tpu.matmul %1, %2, %cst {dimension_numbers = #tpu.dot_dimension_numbers<[0], [0], [1], [1], [0, 1, 1, 1], [], []>} : vector<16x64xf32>, vector<16x256xf32>, vector<64x256xf32> -> vector<64x256xf32>
    %c0_4 = arith.constant 0 : index
    %c0_5 = arith.constant 0 : index
    %4 = vector.load %arg3[%c0_4, %c0_5] : memref<1x256xf32, #tpu.memory_space<vmem>>, vector<1x256xf32>
    %5 = vector.broadcast %4 : vector<1x256xf32> to vector<64x256xf32>
    %6 = arith.addf %3, %5 : vector<64x256xf32>
    %c0_6 = arith.constant 0 : index
    %c0_7 = arith.constant 0 : index
    %7 = vector.load %arg7[%c0_6, %c0_7] : memref<64x256xf32, #tpu.memory_space<vmem>>, vector<64x256xf32>
    tpu.vector_store %arg7[%c0_6, %c0_7], %6 {strides = array<i32>} : memref<64x256xf32, #tpu.memory_space<vmem>>, vector<64x256xf32>,
    %c0_8 = arith.constant 0 : index
    %c0_9 = arith.constant 0 : index
    %8 = vector.load %arg4[%c0_8, %c0_9] : memref<16x8xf32, #tpu.memory_space<vmem>>, vector<16x8xf32>
    %c0_10 = arith.constant 0 : index
    %c0_11 = arith.constant 0 : index
    %c0_12 = arith.constant 0 : index
    %9 = vector.load %arg5[%c0_10, %c0_11, %c0_12] : memref<1x1x256xf32, #tpu.memory_space<vmem>>, vector<1x1x256xf32>
    %10 = vector.shape_cast %9 : vector<1x1x256xf32> to vector<1x256xf32>
    %c0_i32 = arith.constant 0 : i32
    %c16_i32 = arith.constant 16 : i32
    %11 = arith.addi %c0_i32, %c16_i32 : i32
    %c1_i32 = arith.constant 1 : i32
    scf.for %arg8 = %c0_i32 to %11 step %c1_i32  : i32 {
      %12 = arith.sitofp %arg8 : i32 to f32
      %cst_14 = arith.constant 0.466666669 : f32
      %13 = arith.mulf %12, %cst_14 : f32
      %14 = math.floor %13 : f32
      %15 = arith.fptosi %14 : f32 to i32
      %c0_i32_15 = arith.constant 0 : i32
      %c6_i32 = arith.constant 6 : i32
      %16 = arith.maxsi %c0_i32_15, %15 : i32
      %17 = arith.minsi %c6_i32, %16 : i32
      %c1_i32_16 = arith.constant 1 : i32
      %18 = arith.addi %17, %c1_i32_16 : i32
      %c7_i32 = arith.constant 7 : i32
      %19 = arith.minsi %18, %c7_i32 : i32
      %20 = arith.sitofp %17 : i32 to f32
      %21 = arith.subf %13, %20 : f32
      %c8_i32 = arith.constant 8 : i32
      %22 = arith.muli %17, %c8_i32 : i32
      %23 = arith.index_cast %22 : i32 to index
      %c0_17 = arith.constant 0 : index
      %24 = vector.load %arg7[%23, %c0_17] : memref<64x256xf32, #tpu.memory_space<vmem>>, vector<8x256xf32>
      %c8_i32_18 = arith.constant 8 : i32
      %25 = arith.muli %19, %c8_i32_18 : i32
      %26 = arith.index_cast %25 : i32 to index
      %c0_19 = arith.constant 0 : index
      %27 = vector.load %arg7[%26, %c0_19] : memref<64x256xf32, #tpu.memory_space<vmem>>, vector<8x256xf32>
      %28 = arith.subf %27, %24 : vector<8x256xf32>
      %29 = vector.broadcast %21 : f32 to vector<8x256xf32>
      %30 = arith.mulf %29, %28 : vector<8x256xf32>
      %31 = arith.addf %24, %30 : vector<8x256xf32>
      %cst_20 = arith.constant dense<0.000000e+00> : vector<16x256xf32>
      %32 = tpu.matmul %8, %31, %cst_20 {dimension_numbers = #tpu.dot_dimension_numbers<[1], [0], [0], [1], [0, 0, 1, 1], [], []>} : vector<16x8xf32>, vector<8x256xf32>, vector<16x256xf32> -> vector<16x256xf32>
      %cst_21 = arith.constant dense<0xFF800000> : vector<16xf32>
      %33 = vector.multi_reduction <maximumf>, %32, %cst_21 [1] : vector<16x256xf32> to vector<16xf32>
      %34 = vector.shape_cast %33 : vector<16xf32> to vector<16x1xf32>
      %35 = vector.broadcast %34 : vector<16x1xf32> to vector<16x256xf32>
      %36 = arith.subf %32, %35 : vector<16x256xf32>
      %37 = math.exp %36 : vector<16x256xf32>
      %38 = vector.broadcast %10 : vector<1x256xf32> to vector<16x256xf32>
      %39 = arith.mulf %37, %38 : vector<16x256xf32>
      %cst_22 = arith.constant dense<0.000000e+00> : vector<16xf32>
      %40 = vector.multi_reduction <add>, %39, %cst_22 [1] : vector<16x256xf32> to vector<16xf32>
      %cst_23 = arith.constant dense<0.000000e+00> : vector<16xf32>
      %41 = vector.multi_reduction <add>, %37, %cst_23 [1] : vector<16x256xf32> to vector<16xf32>
      %42 = arith.divf %40, %41 : vector<16xf32>
      %43 = vector.shape_cast %42 : vector<16xf32> to vector<1x16xf32>
      %c0_24 = arith.constant 0 : index
      %44 = arith.index_cast %arg8 : i32 to index
      %c0_25 = arith.constant 0 : index
      %45 = vector.load %arg6[%c0_24, %44, %c0_25] : memref<1x16x16xf32, #tpu.memory_space<vmem>>, vector<1x1x16xf32>
      %46 = vector.shape_cast %45 : vector<1x1x16xf32> to vector<1x16xf32>
      %47 = vector.shape_cast %43 : vector<1x16xf32> to vector<1x1x16xf32>
      tpu.vector_store %arg6[%c0_24, %44, %c0_25], %47 {strides = array<i32>} : memref<1x16x16xf32, #tpu.memory_space<vmem>>, vector<1x1x16xf32>,
    }
    %c16_i32_13 = arith.constant 16 : i32
    return
  }
  func.func @transform_0(%arg0: i32) -> (i32, i32, i32) {
    %c0_i32 = arith.constant 0 : i32
    %c0_i32_0 = arith.constant 0 : i32
    %c0_i32_1 = arith.constant 0 : i32
    return %arg0, %c0_i32, %c0_i32_0 : i32, i32, i32
  }
  func.func @transform_1(%arg0: i32) -> (i32, i32) {
    %c0_i32 = arith.constant 0 : i32
    %c0_i32_0 = arith.constant 0 : i32
    %c0_i32_1 = arith.constant 0 : i32
    return %c0_i32, %c0_i32_0 : i32, i32
  }
  func.func @transform_2(%arg0: i32) -> (i32, i32) {
    %c0_i32 = arith.constant 0 : i32
    %c0_i32_0 = arith.constant 0 : i32
    %c0_i32_1 = arith.constant 0 : i32
    return %c0_i32, %c0_i32_0 : i32, i32
  }
  func.func @transform_3(%arg0: i32) -> (i32, i32) {
    %c0_i32 = arith.constant 0 : i32
    %c0_i32_0 = arith.constant 0 : i32
    %c0_i32_1 = arith.constant 0 : i32
    return %c0_i32, %c0_i32_0 : i32, i32
  }
  func.func @transform_4(%arg0: i32) -> (i32, i32, i32) {
    %c0_i32 = arith.constant 0 : i32
    %c0_i32_0 = arith.constant 0 : i32
    %c0_i32_1 = arith.constant 0 : i32
    return %arg0, %c0_i32, %c0_i32_0 : i32, i32, i32
  }
  func.func @transform_5(%arg0: i32) -> (i32, i32, i32) {
    %c0_i32 = arith.constant 0 : i32
    %c0_i32_0 = arith.constant 0 : i32
    %c0_i32_1 = arith.constant 0 : i32
    return %arg0, %c0_i32, %c0_i32_0 : i32, i32, i32
  }
}

</mosaic_0001>

<llo_original>
// kernel: tpu_custom_call.1
$region0: #{tpu_custom_call.1}
  #allocation0 [shape = 'u32[]', space=smem, size = 0x4, offset = 0x4, fixed_abs, tag = 'smem constant byte address 0x4 - core index']
  #allocation1 [shape = 'u32[144,128]{1,0:T(1,128)}', space=vmem, size = 0x12000, scoped, tag = 'internal scratch']
  #allocation2 [shape = 'f32[64,256]{1,0:T(8,128)}', space=vmem, size = 0x10000, scoped, tag = 'scratch operand']
  %s0 = inlined_call_operand.hbm [shape: f32[2,16,64], index: 0, kind: input, shape index: {}]
  %s1 = inlined_call_operand.hbm [shape: f32[16,256], index: 1, kind: input, shape index: {}]
  %s2 = inlined_call_operand.vmem [shape: f32[1,256], index: 2, kind: input, shape index: {}]
  %s3 = inlined_call_operand.vmem [shape: f32[16,8], index: 3, kind: input, shape index: {}]
  %s4 = inlined_call_operand.vmem [shape: f32[2,1,256], index: 4, kind: input, shape index: {}]
  %s5 = inlined_call_operand.hbm [shape: f32[2,16,16], index: 5, kind: output, shape index: {}]
  %s6 = sld [smem:[#allocation0]]
  $region68: #{tpu_custom_call.1} parent=0
    _
  %s8 = ssub.s32 1, %s6
  %s9 = scalar_select 0, %s8, %s6
  $region1: #{tpu_custom_call.1} parent=0
    #allocation3 [shape = 'u8[16384]{0}', space=vmem, size = 0x4000, scoped, tag = 'input window, operand 0']
    #allocation4 [shape = 's32[2]{0}', space=sflag, size = 0x8, scoped, tag = 'scoped memory for tpu_custom_call.1']
    #allocation5 [shape = 's32[2]{0}', space=sflag, size = 0x8, scoped, tag = 'scoped memory for tpu_custom_call.1']
    #allocation6 [shape = 'u8[16384]{0}', space=vmem, size = 0x4000, scoped, tag = 'input window, operand 1, single buffered']
    #allocation7 [shape = 's32[1]{0}', space=sflag, size = 0x4, scoped, tag = 'scoped memory for tpu_custom_call.1']
    #allocation8 [shape = 'u8[16384]{0}', space=vmem, size = 0x4000, scoped, tag = 'output window, operand 0']
    %10 = vsyncpa [#allocation4], 0
    %s11 = scalar_lea.sflag [#allocation4], 1
    %12 = vsyncpa %s11, 0
    %13 = vsyncpa [#allocation7], 0
    %14 = vsyncpa [#allocation5], 0
    %s15 = scalar_lea.sflag [#allocation5], 1
    %16 = vsyncpa %s15, 0
    loop: start=0, step=1, limit=4
    $region2: #{tpu_custom_call.1} parent=1 // loop_pre_header
      _
    $region3: #{tpu_custom_call.1} parent=1 // loop_header
      %s18 = sphi 0, %s22
      %p19 = scmp.ge.s32.totalorder %s18, 4
      %s28 = sphi 0, %s30
      %s31 = sphi 0, %s28
      %s32 = sphi 0, %s31
      %s48 = sphi 0, %s32
      %s52 = sphi 0, %s52
      %s54 = sphi 0, %s52
      %s55 = sphi 0, %s54
      %s69 = sphi 0, %s55
      %s73 = sphi 0, %s73
      %s75 = sphi 0, %s73
      %s76 = sphi 0, %s75
      %s90 = sphi 0, %s76
      %s94 = sphi 0, %s94
      %s96 = sphi 0, %s94
      %s97 = sphi 0, %s96
      %s111 = sphi 0, %s97
      %s117 = sphi 0, %s119
      %s120 = sphi 0, %s117
      %s121 = sphi 0, %s120
      %s137 = sphi 0, %s121
      %s143 = sphi 0, %s145
      %s146 = sphi 0, %s143
      %s147 = sphi 0, %s146
      %s163 = sphi 0, %s147
    $region4: #{tpu_custom_call.1} parent=1 // loop_header_branch
      %21 = sbr.rel (%p19) target = $region8
    $region5: #{tpu_custom_call.1} parent=1 // loop_body
      %s23 = ssub.s32 %s18, 1
      %s24 = ssub.s32 %s18, 2
      %s25 = sadd.s32 %s18, 1
      %s26 = ssub.s32 %s18, %s25
      %p27 = scmp.eq.s32.totalorder %s26, 0
      %s29 = sadd.s32 %s28, 1
      %s30 = scalar_select %p27, %s28, %s29
      %p33 = pneg %p27
      %p34 = scmp.eq.s32.totalorder %s18, 1
      %p35 = por %p33, %p34
      %p36 = scmp.ne.s32.totalorder %s28, %s31
      %p37 = scmp.eq.s32.totalorder %s18, 0
      %p38 = por %p36, %p37
      %p39 = scmp.ne.s32.totalorder %s28, %s31
      %p40 = scmp.eq.s32.totalorder %s23, 1
      %p41 = por %p39, %p40
      %p42 = scmp.ne.s32.totalorder %s31, %s32
      %p43 = scmp.eq.s32.totalorder %s23, 0
      %p44 = por %p42, %p43
      %p45 = scmp.ne.s32.totalorder %s31, %s32
      %p46 = scmp.eq.s32.totalorder %s24, 1
      %p47 = por %p45, %p46
      %p49 = scmp.ne.s32.totalorder %s32, %s48
      %p50 = scmp.eq.s32.totalorder %s24, 0
      %p51 = por %p49, %p50
      %s53 = sadd.s32 %s52, 1
      %p56 = scmp.eq.s32.totalorder %s18, 1
      %p57 = scmp.ne.s32.totalorder %s52, %s54
      %p58 = scmp.eq.s32.totalorder %s18, 0
      %p59 = por %p57, %p58
      %p60 = scmp.ne.s32.totalorder %s52, %s54
      %p61 = scmp.eq.s32.totalorder %s23, 1
      %p62 = por %p60, %p61
      %p63 = scmp.ne.s32.totalorder %s54, %s55
      %p64 = scmp.eq.s32.totalorder %s23, 0
      %p65 = por %p63, %p64
      %p66 = scmp.ne.s32.totalorder %s54, %s55
      %p67 = scmp.eq.s32.totalorder %s24, 1
      %p68 = por %p66, %p67
      %p70 = scmp.ne.s32.totalorder %s55, %s69
      %p71 = scmp.eq.s32.totalorder %s24, 0
      %p72 = por %p70, %p71
      %s74 = sadd.s32 %s73, 1
      %p77 = scmp.eq.s32.totalorder %s18, 1
      %p78 = scmp.ne.s32.totalorder %s73, %s75
      %p79 = scmp.eq.s32.totalorder %s18, 0
      %p80 = por %p78, %p79
      %p81 = scmp.ne.s32.totalorder %s73, %s75
      %p82 = scmp.eq.s32.totalorder %s23, 1
      %p83 = por %p81, %p82
      %p84 = scmp.ne.s32.totalorder %s75, %s76
      %p85 = scmp.eq.s32.totalorder %s23, 0
      %p86 = por %p84, %p85
      %p87 = scmp.ne.s32.totalorder %s75, %s76
      %p88 = scmp.eq.s32.totalorder %s24, 1
      %p89 = por %p87, %p88
      %p91 = scmp.ne.s32.totalorder %s76, %s90
      %p92 = scmp.eq.s32.totalorder %s24, 0
      %p93 = por %p91, %p92
      %s95 = sadd.s32 %s94, 1
      %p98 = scmp.eq.s32.totalorder %s18, 1
      %p99 = scmp.ne.s32.totalorder %s94, %s96
      %p100 = scmp.eq.s32.totalorder %s18, 0
      %p101 = por %p99, %p100
      %p102 = scmp.ne.s32.totalorder %s94, %s96
      %p103 = scmp.eq.s32.totalorder %s23, 1
      %p104 = por %p102, %p103
      %p105 = scmp.ne.s32.totalorder %s96, %s97
      %p106 = scmp.eq.s32.totalorder %s23, 0
      %p107 = por %p105, %p106
      %p108 = scmp.ne.s32.totalorder %s96, %s97
      %p109 = scmp.eq.s32.totalorder %s24, 1
      %p110 = por %p108, %p109
      %p112 = scmp.ne.s32.totalorder %s97, %s111
      %p113 = scmp.eq.s32.totalorder %s24, 0
      %p114 = por %p112, %p113
      %s115 = ssub.s32 %s18, %s25
      %p116 = scmp.eq.s32.totalorder %s115, 0
      %s118 = sadd.s32 %s117, 1
      %s119 = scalar_select %p116, %s117, %s118
      %p122 = pneg %p116
      %p123 = scmp.eq.s32.totalorder %s18, 1
      %p124 = por %p122, %p123
      %p125 = scmp.ne.s32.totalorder %s117, %s120
      %p126 = scmp.eq.s32.totalorder %s18, 0
      %p127 = por %p125, %p126
      %p128 = scmp.ne.s32.totalorder %s117, %s120
      %p129 = scmp.eq.s32.totalorder %s23, 1
      %p130 = por %p128, %p129
      %p131 = scmp.ne.s32.totalorder %s120, %s121
      %p132 = scmp.eq.s32.totalorder %s23, 0
      %p133 = por %p131, %p132
      %p134 = scmp.ne.s32.totalorder %s120, %s121
      %p135 = scmp.eq.s32.totalorder %s24, 1
      %p136 = por %p134, %p135
      %p138 = scmp.ne.s32.totalorder %s121, %s137
      %p139 = scmp.eq.s32.totalorder %s24, 0
      %p140 = por %p138, %p139
      %s141 = ssub.s32 %s18, %s25
      %p142 = scmp.eq.s32.totalorder %s141, 0
      %s144 = sadd.s32 %s143, 1
      %s145 = scalar_select %p142, %s143, %s144
      %p148 = pneg %p142
      %p149 = scmp.eq.s32.totalorder %s18, 1
      %p150 = por %p148, %p149
      %p151 = scmp.ne.s32.totalorder %s143, %s146
      %p152 = scmp.eq.s32.totalorder %s18, 0
      %p153 = por %p151, %p152
      %p154 = scmp.ne.s32.totalorder %s143, %s146
      %p155 = scmp.eq.s32.totalorder %s23, 1
      %p156 = por %p154, %p155
      %p157 = scmp.ne.s32.totalorder %s146, %s147
      %p158 = scmp.eq.s32.totalorder %s23, 0
      %p159 = por %p157, %p158
      %p160 = scmp.ne.s32.totalorder %s146, %s147
      %p161 = scmp.eq.s32.totalorder %s24, 1
      %p162 = por %p160, %p161
      %p164 = scmp.ne.s32.totalorder %s147, %s163
      %p165 = scmp.eq.s32.totalorder %s24, 0
      %p166 = por %p164, %p165
      %p167 = scmp.le.s32.totalorder 1, %s18
      %p168 = scmp.lt.s32.totalorder %s18, 3
      %p169 = pnand %p167, %p168
      %p170 = pneg %p169
      // Predicated region
      $region9: #{tpu_custom_call.1} parent=5 // pred_check
        _
      $region10: #{tpu_custom_call.1} parent=5 // pred_check_branch
        %172 = sbr.rel (%p169) target = $region12
      $region11: #{tpu_custom_call.1} parent=5 // pred_region
        %s173 = ssub.s32 %s18, 1
        // Predicated region
        $region13: #{tpu_custom_call.1} parent=11 // pred_check
          %p174 = pneg %p65
        $region14: #{tpu_custom_call.1} parent=11 // pred_check_branch
          %176 = sbr.rel (%p174) target = $region16
        $region15: #{tpu_custom_call.1} parent=11 // pred_region
          %s178 = ssub.s32 512, 512
          %179 = vsyncadd [#allocation7], %s178
          %s180 = sshll.u32 [#allocation6], 4
          %s181 = int_to_ptr.vmem [resolvable:$true] %s180
          %186 = dma.hbm_to_vmem [thread:$0]  %s1, 512, %s181, [#allocation7], 256, 256, 16
        $region16: #{tpu_custom_call.1} parent=11 // pred_fallthru
          _
        // Predicated region
        $region17: #{tpu_custom_call.1} parent=11 // pred_check
          %p187 = pneg %p86
        $region18: #{tpu_custom_call.1} parent=11 // pred_check_branch
          %189 = sbr.rel (%p187) target = $region20
        $region19: #{tpu_custom_call.1} parent=11 // pred_region
          _
        $region20: #{tpu_custom_call.1} parent=11 // pred_fallthru
          _
        // Predicated region
        $region21: #{tpu_custom_call.1} parent=11 // pred_check
          %p190 = pneg %p107
        $region22: #{tpu_custom_call.1} parent=11 // pred_check_branch
          %192 = sbr.rel (%p190) target = $region24
        $region23: #{tpu_custom_call.1} parent=11 // pred_region
          _
        $region24: #{tpu_custom_call.1} parent=11 // pred_fallthru
          _
      $region12: #{tpu_custom_call.1} parent=5 // pred_fallthru
        _
      %p193 = scmp.lt.s32.totalorder %s18, 2
      // Predicated region
      $region25: #{tpu_custom_call.1} parent=5 // pred_check
        %p194 = pneg %p193
      $region26: #{tpu_custom_call.1} parent=5 // pred_check_branch
        %196 = sbr.rel (%p194) target = $region28
      $region27: #{tpu_custom_call.1} parent=5 // pred_region
        // Predicated region
        $region29: #{tpu_custom_call.1} parent=27 // pred_check
          %p197 = pneg %p38
        $region30: #{tpu_custom_call.1} parent=27 // pred_check_branch
          %199 = sbr.rel (%p197) target = $region32
        $region31: #{tpu_custom_call.1} parent=27 // pred_region
          %s200 = sand.u32 %s28, 1
          %s201 = scalar_lea.sflag [#allocation4], %s200
          %s202 = sand.u32 %s28, 1
          %s203 = smul.addr %s202, 16
          %s204 = scalar_lea.vmem [#allocation3], %s203
          %s206 = ssub.s32 256, 256
          %207 = vsyncadd %s201, %s206
          %s208 = smul.addr %s18, 2
          %s209 = smul.addr %s208, 128
          %s210 = scalar_lea.hbm %s0, %s209
          %s211 = sshll.u32 %s204, 4
          %s212 = int_to_ptr.vmem [resolvable:$true] %s211
          %217 = dma.hbm_to_vmem [thread:$0]  %s210, 256, %s212, %s201, 128, 128, 8
        $region32: #{tpu_custom_call.1} parent=27 // pred_fallthru
          _
        // Predicated region
        $region33: #{tpu_custom_call.1} parent=27 // pred_check
          %p218 = pneg %p127
        $region34: #{tpu_custom_call.1} parent=27 // pred_check_branch
          %220 = sbr.rel (%p218) target = $region36
        $region35: #{tpu_custom_call.1} parent=27 // pred_region
          %p221 = scmp.lt.s32.totalorder %s18, 1
          %s222 = scalar_select %p221, %s18, 1
          %s223 = smul.addr %s222, 2
          %s224 = scalar_lea.vmem %s4, %s223
        $region36: #{tpu_custom_call.1} parent=27 // pred_fallthru
          _
      $region28: #{tpu_custom_call.1} parent=5 // pred_fallthru
        _
      %p225 = scmp.le.s32.totalorder 1, %s18
      %p226 = scmp.lt.s32.totalorder %s18, 3
      %p227 = pnand %p225, %p226
      %p228 = pneg %p227
      // Predicated region
      $region37: #{tpu_custom_call.1} parent=5 // pred_check
        _
      $region38: #{tpu_custom_call.1} parent=5 // pred_check_branch
        %230 = sbr.rel (%p227) target = $region40
      $region39: #{tpu_custom_call.1} parent=5 // pred_region
        %s231 = ssub.s32 %s18, 1
        %s232 = sand.u32 %s31, 1
        %s233 = scalar_lea.sflag [#allocation4], %s232
        %s234 = sand.u32 %s31, 1
        %s235 = smul.addr %s234, 16
        %s236 = scalar_lea.vmem [#allocation3], %s235
        // Predicated region
        $region41: #{tpu_custom_call.1} parent=39 // pred_check
          %p237 = pneg %p44
        $region42: #{tpu_custom_call.1} parent=39 // pred_check_branch
          %239 = sbr.rel (%p237) target = $region44
        $region43: #{tpu_custom_call.1} parent=39 // pred_region
          %240 = dma.done %s233, 256
        $region44: #{tpu_custom_call.1} parent=39 // pred_fallthru
          _
        // Predicated region
        $region45: #{tpu_custom_call.1} parent=39 // pred_check
          %p241 = pneg %p65
        $region46: #{tpu_custom_call.1} parent=39 // pred_check_branch
          %243 = sbr.rel (%p241) target = $region48
        $region47: #{tpu_custom_call.1} parent=39 // pred_region
          %244 = dma.done [#allocation7], 512
        $region48: #{tpu_custom_call.1} parent=39 // pred_fallthru
          _
        %s245 = sand.u32 %s31, 1
        %s246 = scalar_lea.sflag [#allocation4], %s245
        %s247 = sand.u32 %s31, 1
        %s248 = smul.addr %s247, 16
        %s249 = scalar_lea.vmem [#allocation3], %s248
        %p250 = pneg %p44
        %p251 = pneg %p41
        %p252 = pneg %p65
        %p253 = pneg %p62
        %p254 = pneg %p86
        %p255 = pneg %p83
        %p256 = pneg %p107
        %p257 = pneg %p104
        %p258 = scmp.lt.s32.totalorder %s23, 1
        %s259 = scalar_select %p258, %s23, 1
        %s260 = smul.addr %s259, 2
        %s261 = scalar_lea.vmem %s4, %s260
        %p262 = pneg %p133
        %p263 = pneg %p130
        %p264 = pneg %p159
        %p265 = pneg %p156
        %s266 = sand.u32 %s146, 1
        %s267 = scalar_lea.sflag [#allocation5], %s266
        %s268 = sand.u32 %s146, 1
        %s269 = smul.addr %s268, 16
        %s270 = scalar_lea.vmem [#allocation8], %s269
        %p271 = scmp.lt.s32.totalorder %s23, 1
        %s272 = scalar_select %p271, %s23, 1
        %s273 = smul.addr %s272, 2
        %s274 = scalar_lea.vmem %s4, %s273
        %v275 = vld [vmem:[%s236] sm:$0xff]
        %v276 = vld [vmem:[%s236 + $0x8] sm:$0xff]
        %v277 = vld [vmem:[#allocation6] sm:$0xff]
        %v278 = vld [vmem:[#allocation6 + $0x8] sm:$0xff]
        %v279 = vld [vmem:[#allocation6 + $0x10] sm:$0xff]
        %v280 = vld [vmem:[#allocation6 + $0x18] sm:$0xff]
        %v281 = vld [vmem:[%s2] sm:$0x3]
        %v283 = vlaneseq
        %v284 = vshrl.u32 %v283, 7
        %v285 = vsub.s32 0, %v284
        %v286 = vrot.slane %v281, %v285
        %v287 = vlaneseq
        %v288 = vshrl.u32 %v287, 7
        %v289 = vsub.s32 1, %v288
        %v290 = vrot.slane %v281, %v289
        %293 = vxpose.xlu0.b32.start [1/16] %v275, 128
        %294 = vxpose.xlu0.b32.cont [2/16] %v276, 128
        %295 = vxpose.xlu0.b32.cont [3/16] 0.0, 128
        %296 = vxpose.xlu0.b32.cont [4/16] 0.0, 128
        %297 = vxpose.xlu0.b32.cont [5/16] 0.0, 128
        %298 = vxpose.xlu0.b32.cont [6/16] 0.0, 128
        %299 = vxpose.xlu0.b32.cont [7/16] 0.0, 128
        %300 = vxpose.xlu0.b32.cont [8/16] 0.0, 128
        %301 = vxpose.xlu0.b32.cont [9/16] 0.0, 128
        %302 = vxpose.xlu0.b32.cont [10/16] 0.0, 128
        %303 = vxpose.xlu0.b32.cont [11/16] 0.0, 128
        %304 = vxpose.xlu0.b32.cont [12/16] 0.0, 128
        %305 = vxpose.xlu0.b32.cont [13/16] 0.0, 128
        %306 = vxpose.xlu0.b32.cont [14/16] 0.0, 128
        %307 = vxpose.xlu0.b32.cont [15/16] 0.0, 128
        %308 = vxpose.xlu0.b32.end [16/16] 0.0, 128
        %v309 = vpop.trf.xlu0
        %v310 = vpop.trf.xlu0
        %v311 = vpop.trf.xlu0
        %v312 = vpop.trf.xlu0
        %v313 = vpop.trf.xlu0
        %v314 = vpop.trf.xlu0
        %v315 = vpop.trf.xlu0
        %v316 = vpop.trf.xlu0
        %v317 = vpop.trf.xlu0
        %v318 = vpop.trf.xlu0
        %v319 = vpop.trf.xlu0
        %v320 = vpop.trf.xlu0
        %v321 = vpop.trf.xlu0
        %v322 = vpop.trf.xlu0
        %v323 = vpop.trf.xlu0
        %v324 = vpop.trf.xlu0
        %vm325 = vcmask 130048
        %v327 = vsel %vm325, %v309, 0
        %v330 = vsel %vm325, %v310, 0
        %v333 = vsel %vm325, %v311, 0
        %v336 = vsel %vm325, %v312, 0
        %v339 = vsel %vm325, %v313, 0
        %v342 = vsel %vm325, %v314, 0
        %v345 = vsel %vm325, %v315, 0
        %v348 = vsel %vm325, %v316, 0
        %350 = vmatprep.subr.mxu0 %v278
        %351 = vmatpush1.msra.mxu0 %v277
        %352 = vmatprep.subr.mxu0 %v280
        %353 = vmatpush1.msra.mxu0 %v279
        %354 = vmatprep.subr.mxu0 0.0
        %355 = vmatpush1.msra.mxu0 0.0
        %356 = vmatprep.subr.mxu0 0.0
        %357 = vmatpush1.msra.mxu0 0.0
        %358 = vmatprep.subr.mxu0 0.0
        %359 = vmatpush1.msra.mxu0 0.0
        %360 = vmatprep.subr.mxu0 0.0
        %361 = vmatpush1.msra.mxu0 0.0
        %362 = vmatprep.subr.mxu0 0.0
        %363 = vmatpush1.msra.mxu0 0.0
        %364 = vmatprep.subr.mxu0 0.0
        %365 = vmatpush1.msra.mxu0 0.0
        %366 = vmatprep.subr.mxu0 0.0
        %367 = vmatpush1.msra.mxu0 0.0
        %368 = vmatprep.subr.mxu0 0.0
        %369 = vmatpush1.msra.mxu0 0.0
        %370 = vmatprep.subr.mxu0 0.0
        %371 = vmatpush1.msra.mxu0 0.0
        %372 = vmatprep.subr.mxu0 0.0
        %373 = vmatpush1.msra.mxu0 0.0
        %374 = vmatprep.subr.mxu0 0.0
        %375 = vmatpush1.msra.mxu0 0.0
        %376 = vmatprep.subr.mxu0 0.0
        %377 = vmatpush1.msra.mxu0 0.0
        %378 = vmatprep.subr.mxu0 0.0
        %379 = vmatpush1.msra.mxu0 0.0
        %380 = vmatprep.subr.mxu0 0.0
        %381 = vmatpush1.msra.mxu0 0.0
        %382 = vmatprep.subr.mxu0 0.0
        %383 = vmatpush1.msra.mxu0 0.0
        %384 = vmatprep.subr.mxu0 0.0
        %385 = vmatpush1.msra.mxu0 0.0
        %386 = vmatprep.subr.mxu0 0.0
        %387 = vmatpush1.msra.mxu0 0.0
        %388 = vmatprep.subr.mxu0 0.0
        %389 = vmatpush1.msra.mxu0 0.0
        %390 = vmatprep.subr.mxu0 0.0
        %391 = vmatpush1.msra.mxu0 0.0
        %392 = vmatprep.subr.mxu0 0.0
        %393 = vmatpush1.msra.mxu0 0.0
        %394 = vmatprep.subr.mxu0 0.0
        %395 = vmatpush1.msra.mxu0 0.0
        %396 = vmatprep.subr.mxu0 0.0
        %397 = vmatpush1.msra.mxu0 0.0
        %398 = vmatprep.subr.mxu0 0.0
        %399 = vmatpush1.msra.mxu0 0.0
        %400 = vmatprep.subr.mxu0 0.0
        %401 = vmatpush1.msra.mxu0 0.0
        %402 = vmatprep.subr.mxu0 0.0
        %403 = vmatpush1.msra.mxu0 0.0
        %404 = vmatprep.subr.mxu0 0.0
        %405 = vmatpush1.msra.mxu0 0.0
        %406 = vmatprep.subr.mxu0 0.0
        %407 = vmatpush1.msra.mxu0 0.0
        %408 = vmatprep.subr.mxu0 0.0
        %409 = vmatpush1.msra.mxu0 0.0
        %410 = vmatprep.subr.mxu0 0.0
        %411 = vmatpush1.msra.mxu0 0.0
        %412 = vmatprep.subr.mxu0 0.0
        %413 = vmatpush1.msra.mxu0 0.0
        %414 = vmatprep.mubr.f32.mxu0 0.0
        %415 = vmatmul.mubr.f32.gmra.mrb[0].mxu0 %v327
        %v416 = vpop.f32.mrb[0].mxu0
        %v417 = vadd.f32 %v286, %v416
        %v418 = vpop.f32.mrb[0].mxu0
        %v419 = vadd.f32 %v290, %v418
        %420 = vmatprep.mubr.f32.mxu0 0.0
        %421 = vmatmul.mubr.f32.gmra.mrb[0].mxu0 %v330
        %v422 = vpop.f32.mrb[0].mxu0
        %v423 = vadd.f32 %v286, %v422
        %v424 = vpop.f32.mrb[0].mxu0
        %v425 = vadd.f32 %v290, %v424
        %426 = vmatprep.mubr.f32.mxu0 0.0
        %427 = vmatmul.mubr.f32.gmra.mrb[0].mxu0 %v333
        %v428 = vpop.f32.mrb[0].mxu0
        %v429 = vadd.f32 %v286, %v428
        %v430 = vpop.f32.mrb[0].mxu0
        %v431 = vadd.f32 %v290, %v430
        %432 = vmatprep.mubr.f32.mxu0 0.0
        %433 = vmatmul.mubr.f32.gmra.mrb[0].mxu0 %v336
        %v434 = vpop.f32.mrb[0].mxu0
        %v435 = vadd.f32 %v286, %v434
        %v436 = vpop.f32.mrb[0].mxu0
        %v437 = vadd.f32 %v290, %v436
        %438 = vmatprep.mubr.f32.mxu0 0.0
        %439 = vmatmul.mubr.f32.gmra.mrb[0].mxu0 %v339
        %v440 = vpop.f32.mrb[0].mxu0
        %v441 = vadd.f32 %v286, %v440
        %v442 = vpop.f32.mrb[0].mxu0
        %v443 = vadd.f32 %v290, %v442
        %444 = vmatprep.mubr.f32.mxu0 0.0
        %445 = vmatmul.mubr.f32.gmra.mrb[0].mxu0 %v342
        %v446 = vpop.f32.mrb[0].mxu0
        %v447 = vadd.f32 %v286, %v446
        %v448 = vpop.f32.mrb[0].mxu0
        %v449 = vadd.f32 %v290, %v448
        %450 = vmatprep.mubr.f32.mxu0 0.0
        %451 = vmatmul.mubr.f32.gmra.mrb[0].mxu0 %v345
        %v452 = vpop.f32.mrb[0].mxu0
        %v453 = vadd.f32 %v286, %v452
        %v454 = vpop.f32.mrb[0].mxu0
        %v455 = vadd.f32 %v290, %v454
        %456 = vmatprep.mubr.f32.mxu0 0.0
        %457 = vmatmul.mubr.f32.gmra.mrb[0].mxu0 %v348
        %v458 = vpop.f32.mrb[0].mxu0
        %v459 = vadd.f32 %v286, %v458
        %v460 = vpop.f32.mrb[0].mxu0
        %v461 = vadd.f32 %v290, %v460
        %462 = vdwg.mxu0
        %463 = vst [vmem:[#allocation2] sm:$0xff] %v417
        %464 = vst [vmem:[#allocation2 + $0x8] sm:$0xff] %v419
        %465 = vst [vmem:[#allocation2 + $0x10] sm:$0xff] %v423
        %466 = vst [vmem:[#allocation2 + $0x18] sm:$0xff] %v425
        %467 = vst [vmem:[#allocation2 + $0x20] sm:$0xff] %v429
        %468 = vst [vmem:[#allocation2 + $0x28] sm:$0xff] %v431
        %469 = vst [vmem:[#allocation2 + $0x30] sm:$0xff] %v435
        %470 = vst [vmem:[#allocation2 + $0x38] sm:$0xff] %v437
        %471 = vst [vmem:[#allocation2 + $0x40] sm:$0xff] %v441
        %472 = vst [vmem:[#allocation2 + $0x48] sm:$0xff] %v443
        %473 = vst [vmem:[#allocation2 + $0x50] sm:$0xff] %v447
        %474 = vst [vmem:[#allocation2 + $0x58] sm:$0xff] %v449
        %475 = vst [vmem:[#allocation2 + $0x60] sm:$0xff] %v453
        %476 = vst [vmem:[#allocation2 + $0x68] sm:$0xff] %v455
        %477 = vst [vmem:[#allocation2 + $0x70] sm:$0xff] %v459
        %478 = vst [vmem:[#allocation2 + $0x78] sm:$0xff] %v461
        %v479 = vld [vmem:[%s3] sm:$0xff]
        %v480 = vld [vmem:[%s3 + $0x8] sm:$0xff]
        %v481 = vld [vmem:[%s274] sm:$0x3]
        loop: start=0, step=1, limit=16
        $region49: #{tpu_custom_call.1} parent=39 // loop_pre_header
          _
        $region50: #{tpu_custom_call.1} parent=39 // loop_header
          %s483 = sphi 0, %s487
          %p484 = scmp.ge.s32.totalorder %s483, 16
        $region51: #{tpu_custom_call.1} parent=39 // loop_header_branch
          %486 = sbr.rel (%p484) target = $region55
        $region52: #{tpu_custom_call.1} parent=39 // loop_body
          %s488 = scvt.s32.f32 %s483
          %s489 = smul.f32 %s488, 0.46666667
          %s490 = sfloor.f32 %s489
          %s491 = scvt.f32.s32.to.zero.pseudo %s490
          %p492 = scmp.gt.s32.totalorder %s491, 0
          %s493 = scalar_select %p492, %s491, 0
          %p494 = scmp.lt.s32.totalorder %s493, 6
          %s495 = scalar_select %p494, %s493, 6
          %s496 = sadd.s32 %s495, 1
          %p497 = scmp.lt.s32.totalorder %s496, 7
          %s498 = scalar_select %p497, %s496, 7
          %s499 = scvt.s32.f32 %s495
          %s500 = ssub.f32 %s489, %s499
          %s501 = smul.u32 %s495, 8
          %s502 = sshra.s32 %s501, 3
          %s503 = sand.u32 %s501, 7
          %s504 = smul.u32 %s502, 2
          %s505 = smul.addr %s504, 8
          %s506 = scalar_lea.vmem [#allocation2], %s505
          %v507 = vld [vmem:[%s506] sm:$0xff]
          %v508 = vld [vmem:[%s506 + $0x8] sm:$0xff]
          %s509 = smul.u32 %s498, 8
          %s510 = sshra.s32 %s509, 3
          %s511 = sand.u32 %s509, 7
          %s512 = smul.u32 %s510, 2
          %s513 = smul.addr %s512, 8
          %s514 = scalar_lea.vmem [#allocation2], %s513
          %v515 = vld [vmem:[%s514] sm:$0xff]
          %v516 = vld [vmem:[%s514 + $0x8] sm:$0xff]
          %v517 = vsub.f32 %v515, %v507
          %v518 = vsub.f32 %v516, %v508
          %v519 = vstv %s500
          %v520 = vmul.f32 %v519, %v517
          %v521 = vmul.f32 %v519, %v518
          %v522 = vadd.f32 %v507, %v520
          %v523 = vadd.f32 %v508, %v521
          %vm524 = vcmask 64512
          %v526 = vsel %vm524, %v479, 0
          %v529 = vsel %vm524, %v480, 0
          %531 = vmatprep.subr.mxu0 %v523
          %532 = vmatpush1.msra.mxu0 %v522
          %533 = vmatprep.subr.mxu0 0.0
          %534 = vmatpush1.msra.mxu0 0.0
          %535 = vmatprep.subr.mxu0 0.0
          %536 = vmatpush1.msra.mxu0 0.0
          %537 = vmatprep.subr.mxu0 0.0
          %538 = vmatpush1.msra.mxu0 0.0
          %539 = vmatprep.subr.mxu0 0.0
          %540 = vmatpush1.msra.mxu0 0.0
          %541 = vmatprep.subr.mxu0 0.0
          %542 = vmatpush1.msra.mxu0 0.0
          %543 = vmatprep.subr.mxu0 0.0
          %544 = vmatpush1.msra.mxu0 0.0
          %545 = vmatprep.subr.mxu0 0.0
          %546 = vmatpush1.msra.mxu0 0.0
          %547 = vmatprep.subr.mxu0 0.0
          %548 = vmatpush1.msra.mxu0 0.0
          %549 = vmatprep.subr.mxu0 0.0
          %550 = vmatpush1.msra.mxu0 0.0
          %551 = vmatprep.subr.mxu0 0.0
          %552 = vmatpush1.msra.mxu0 0.0
          %553 = vmatprep.subr.mxu0 0.0
          %554 = vmatpush1.msra.mxu0 0.0
          %555 = vmatprep.subr.mxu0 0.0
          %556 = vmatpush1.msra.mxu0 0.0
          %557 = vmatprep.subr.mxu0 0.0
          %558 = vmatpush1.msra.mxu0 0.0
          %559 = vmatprep.subr.mxu0 0.0
          %560 = vmatpush1.msra.mxu0 0.0
          %561 = vmatprep.subr.mxu0 0.0
          %562 = vmatpush1.msra.mxu0 0.0
          %563 = vmatprep.subr.mxu0 0.0
          %564 = vmatpush1.msra.mxu0 0.0
          %565 = vmatprep.subr.mxu0 0.0
          %566 = vmatpush1.msra.mxu0 0.0
          %567 = vmatprep.subr.mxu0 0.0
          %568 = vmatpush1.msra.mxu0 0.0
          %569 = vmatprep.subr.mxu0 0.0
          %570 = vmatpush1.msra.mxu0 0.0
          %571 = vmatprep.subr.mxu0 0.0
          %572 = vmatpush1.msra.mxu0 0.0
          %573 = vmatprep.subr.mxu0 0.0
          %574 = vmatpush1.msra.mxu0 0.0
          %575 = vmatprep.subr.mxu0 0.0
          %576 = vmatpush1.msra.mxu0 0.0
          %577 = vmatprep.subr.mxu0 0.0
          %578 = vmatpush1.msra.mxu0 0.0
          %579 = vmatprep.subr.mxu0 0.0
          %580 = vmatpush1.msra.mxu0 0.0
          %581 = vmatprep.subr.mxu0 0.0
          %582 = vmatpush1.msra.mxu0 0.0
          %583 = vmatprep.subr.mxu0 0.0
          %584 = vmatpush1.msra.mxu0 0.0
          %585 = vmatprep.subr.mxu0 0.0
          %586 = vmatpush1.msra.mxu0 0.0
          %587 = vmatprep.subr.mxu0 0.0
          %588 = vmatpush1.msra.mxu0 0.0
          %589 = vmatprep.subr.mxu0 0.0
          %590 = vmatpush1.msra.mxu0 0.0
          %591 = vmatprep.subr.mxu0 0.0
          %592 = vmatpush1.msra.mxu0 0.0
          %593 = vmatprep.subr.mxu0 0.0
          %594 = vmatpush1.msra.mxu0 0.0
          %595 = vmatprep.mubr.f32.mxu0 0.0
          %596 = vmatmul.mubr.f32.gmra.mrb[0].mxu0 %v526
          %v597 = vpop.f32.mrb[0].mxu0
          %v598 = vadd.f32 0.0, %v597
          %v599 = vpop.f32.mrb[0].mxu0
          %v600 = vadd.f32 0.0, %v599
          %601 = vmatprep.mubr.f32.mxu0 0.0
          %602 = vmatmul.mubr.f32.gmra.mrb[0].mxu0 %v529
          %v603 = vpop.f32.mrb[0].mxu0
          %v604 = vadd.f32 0.0, %v603
          %v605 = vpop.f32.mrb[0].mxu0
          %v606 = vadd.f32 0.0, %v605
          %607 = vdwg.mxu0
          %v608 = vmax.f32 %v598, %v600
          %609 = vmax.xlane.f32.xlu0 %v608
          %v610 = vpop.xlane.xlu0 %609
          %v611 = vmax.f32 %v604, %v606
          %612 = vmax.xlane.f32.xlu0 %v611
          %v613 = vpop.xlane.xlu0 %612
          %v614 = vsub.f32 %v598, %v610
          %v615 = vsub.f32 %v600, %v610
          %v616 = vsub.f32 %v604, %v613
          %v617 = vsub.f32 %v606, %v613
          %v618 = vmul.f32 %v614, 1.442695
          %v619 = vpow.pop %v618
          %v620 = vmul.f32 %v615, 1.442695
          %v621 = vpow.pop %v620
          %v622 = vmul.f32 %v616, 1.442695
          %v623 = vpow.pop %v622
          %v624 = vmul.f32 %v617, 1.442695
          %v625 = vpow.pop %v624
          %v627 = vlaneseq
          %v628 = vshrl.u32 %v627, 7
          %v629 = vsub.s32 0, %v628
          %v630 = vrot.slane %v481, %v629
          %v631 = vlaneseq
          %v632 = vshrl.u32 %v631, 7
          %v633 = vsub.s32 1, %v632
          %v634 = vrot.slane %v481, %v633
          %v637 = vmul.f32 %v619, %v630
          %v638 = vmul.f32 %v621, %v634
          %v639 = vmul.f32 %v623, %v630
          %v640 = vmul.f32 %v625, %v634
          %v641 = vadd.f32 %v637, %v638
          %642 = vadd.xlane.f32.xlu0 %v641
          %v643 = vpop.xlane.xlu0 %642
          %v644 = vadd.f32 %v639, %v640
          %645 = vadd.xlane.f32.xlu0 %v644
          %v646 = vpop.xlane.xlu0 %645
          %v647 = vadd.f32 %v619, %v621
          %648 = vadd.xlane.f32.xlu0 %v647
          %v649 = vpop.xlane.xlu0 %648
          %v650 = vadd.f32 %v623, %v625
          %651 = vadd.xlane.f32.xlu0 %v650
          %v652 = vpop.xlane.xlu0 %651
          %v653 = vrcp.pop %v649
          %v654 = vmul.f32 %v643, %v653
          %v655 = vrcp.pop %v652
          %v656 = vmul.f32 %v646, %v655
          %v659 = vlaneseq
          %v660 = vand.u32 %v659, 127
          %v661 = vlaneseq
          %v662 = vshrl.u32 %v661, 7
          %v663 = vsub.s32 %v660, %v662
          %v664 = vrot.slane %v654, %v663
          %v665 = vadd.s32 %v660, 4294967288
          %v666 = vlaneseq
          %v667 = vshrl.u32 %v666, 7
          %v668 = vsub.s32 %v665, %v667
          %v669 = vrot.slane %v656, %v668
          %vm670 = vcmask 130112
          %v671 = vsel %vm670, %v669, %v664
          %s673 = scalar_lea.vmem %s270, %s483 [#allocation8]
          %vm674 = vcmask 122880
          %675 = vst.msk [vmem:[%s673] sm:$0x1] %vm674, %v671
        $region53: #{tpu_custom_call.1} parent=39 // loop_footer
          %s487 = sadd.s32 1, %s483
        $region54: #{tpu_custom_call.1} parent=39 // loop_footer_branch
          %482 = sbr.rel target = $region50
        $region55: #{tpu_custom_call.1} parent=39 // loop_exit
          _
        %s676 = sand.u32 %s146, 1
        %s677 = scalar_lea.sflag [#allocation5], %s676
        %s678 = sand.u32 %s146, 1
        %s679 = smul.addr %s678, 16
        %s680 = scalar_lea.vmem [#allocation8], %s679
        // Predicated region
        $region56: #{tpu_custom_call.1} parent=39 // pred_check
          %p681 = pneg %p156
        $region57: #{tpu_custom_call.1} parent=39 // pred_check_branch
          %683 = sbr.rel (%p681) target = $region59
        $region58: #{tpu_custom_call.1} parent=39 // pred_region
          %s685 = ssub.s32 256, 256
          %686 = vsyncadd %s677, %s685
          %s687 = smul.addr %s23, 2
          %s688 = smul.addr %s687, 128
          %s689 = scalar_lea.hbm %s5, %s688
          %s690 = sshll.u32 %s680, 4
          %s691 = int_to_ptr.vmem [resolvable:$true] %s690
          %696 = dma.vmem_to_hbm [thread:$0]  %s691, 256, %s689, %s677, 128, 128, 8
        $region59: #{tpu_custom_call.1} parent=39 // pred_fallthru
          _
      $region40: #{tpu_custom_call.1} parent=5 // pred_fallthru
        _
      %p697 = scmp.le.s32.totalorder 2, %s18
      // Predicated region
      $region60: #{tpu_custom_call.1} parent=5 // pred_check
        %p698 = pneg %p697
      $region61: #{tpu_custom_call.1} parent=5 // pred_check_branch
        %700 = sbr.rel (%p698) target = $region63
      $region62: #{tpu_custom_call.1} parent=5 // pred_region
        %s701 = ssub.s32 %s18, 2
        // Predicated region
        $region64: #{tpu_custom_call.1} parent=62 // pred_check
          %p702 = pneg %p162
        $region65: #{tpu_custom_call.1} parent=62 // pred_check_branch
          %704 = sbr.rel (%p702) target = $region67
        $region66: #{tpu_custom_call.1} parent=62 // pred_region
          %s705 = sand.u32 %s147, 1
          %s706 = scalar_lea.sflag [#allocation5], %s705
          %s707 = sand.u32 %s147, 1
          %s708 = smul.addr %s707, 16
          %s709 = scalar_lea.vmem [#allocation8], %s708
          %710 = dma.done %s706, 256
        $region67: #{tpu_custom_call.1} parent=62 // pred_fallthru
          _
      $region63: #{tpu_custom_call.1} parent=5 // pred_fallthru
        _
    $region6: #{tpu_custom_call.1} parent=1 // loop_footer
      %s22 = sadd.s32 1, %s18
    $region7: #{tpu_custom_call.1} parent=1 // loop_footer_branch
      %17 = sbr.rel target = $region3
    $region8: #{tpu_custom_call.1} parent=1 // loop_exit
      _
    %711 = vsyncpa [#allocation4], 1
    %s712 = scalar_lea.sflag [#allocation4], 1
    %713 = vsyncpa %s712, 1
    %714 = vsyncpa [#allocation7], 1
    %715 = vsyncpa [#allocation5], 1
    %s716 = scalar_lea.sflag [#allocation5], 1
    %717 = vsyncpa %s716, 1

</llo_original>
